<compile_context>
chip_gen: v7x
topology: tpu7x:2x2x1
jax: 0.10.0
libtpu: 0.0.40
codegen_flags: <defaults>
</compile_context>

<pallas_src>
import functools

import jax
import jax.numpy as jnp
from jax.experimental import pallas as pl
from jax.experimental.pallas import tpu as pltpu


_LANES = 128                 # lane-dense last dim (full vreg width)
_TILE_ROWS = 1024            # rows of the 128-wide slab per grid step
_MIN_PALLAS_BYTES = 1 << 20  # below 1 MiB, a pallas_call costs more than the copy


def _identity_kernel(x_ref, o_ref):
    # Elementwise pass-through of the current lane-dense tile.
    o_ref[...] = x_ref[...]


def _identity_pallas_2d(x2d):
    """Tiled, pipelined, aliased identity copy of a (rows, 128) slab."""
    rows, cols = x2d.shape
    tile_r = min(_TILE_ROWS, rows)
    grid = (pl.cdiv(rows, tile_r),)
    return pl.pallas_call(
        _identity_kernel,
        out_shape=jax.ShapeDtypeStruct((rows, cols), x2d.dtype),
        grid=grid,
        in_specs=[pl.BlockSpec((tile_r, cols), lambda i: (i, 0))],
        out_specs=pl.BlockSpec((tile_r, cols), lambda i: (i, 0)),
        # Identity: reuse the input HBM buffer as the output buffer.
        input_output_aliases={0: 0},
        compiler_params=pltpu.CompilerParams(
            # Parallel grid axis -> shardable across v7x's 2 TensorCores;
            # neutral on v5e/v6e.
            dimension_semantics=("parallel",),
            # (tile_r, 128) fp32 double-buffered in+out is ~2 MiB at
            # TILE_ROWS=1024 -- comfortably under v7x's 64 MiB VMEM.
            vmem_limit_bytes=32 * 1024 * 1024,
        ),
    )(x2d)


def decoder_forward(x, *, force_pallas=False):
    """Identity forward pass of `Decoder`.

    Args:
      x: jnp.ndarray of any shape / dtype (typically NCHW for the VAE).
      force_pallas: run the Pallas kernel even for tiny inputs (testing).
    Returns:
      jnp.ndarray identical to `x` (same shape, dtype, values).
    """
    total = x.size
    nbytes = total * jnp.dtype(x.dtype).itemsize
    if total == 0 or (nbytes < _MIN_PALLAS_BYTES and not force_pallas):
        # Tiny tensor: pure identity, no kernel launch (per perf review).
        return x

    # Flatten to a lane-dense 2D slab: last dim = 128 lanes (pad if needed).
    flat = x.reshape(-1)
    pad = (-total) % _LANES
    if pad:
        flat = jnp.pad(flat, (0, pad))
    x2d = flat.reshape(-1, _LANES)

    out2d = _identity_pallas_2d(x2d)

    out_flat = out2d.reshape(-1)
    if pad:
        out_flat = out_flat[:total]
    return out_flat.reshape(x.shape)


if __name__ == "__main__":
    key = jax.random.PRNGKey(0)
    # Small NCHW input consistent with a VAE decoder latent-ish tensor.
    x = jax.random.normal(key, (2, 4, 16, 16), dtype=jnp.float32)

    # 1) Default path: tensor is tiny -> kernel is skipped, pure identity.
    y_fast = jax.block_until_ready(decoder_forward(x))
    assert y_fast.shape == x.shape and y_fast.dtype == x.dtype
    assert bool(jnp.all(y_fast == x))

    # 2) Forced Pallas path: exercise the tiled, lane-dense, aliased kernel.
    fwd = jax.jit(functools.partial(decoder_forward, force_pallas=True))
    y = jax.block_until_ready(fwd(x))

    assert y.shape == x.shape
    assert y.dtype == x.dtype
    assert bool(jnp.all(y == x))

    print("KERNEL_OK")
</pallas_src>

<mosaic_0001>
module attributes {stable_mosaic.version = 11 : i64} {
  func.func @_identity_kernel(%arg0: i32, %arg1: memref<16x128xf32, #tpu.memory_space<vmem>>, %arg2: memref<16x128xf32, #tpu.memory_space<vmem>>) attributes {dimension_semantics = [#tpu.dimension_semantics<parallel>], iteration_bounds = array<i64: 1>, scalar_prefetch = 0 : i64, scratch_operands = 0 : i64, tpu.core_type = #tpu.core_type<tc>, window_params = [{transform_indices = @transform_0, window_bounds = array<i64: 16, 128>}, {transform_indices = @transform_1, window_bounds = array<i64: 16, 128>}]} {
    %c0 = arith.constant 0 : index
    %c0_0 = arith.constant 0 : index
    %0 = vector.load %arg1[%c0, %c0_0] : memref<16x128xf32, #tpu.memory_space<vmem>>, vector<16x128xf32>
    %c0_1 = arith.constant 0 : index
    %c0_2 = arith.constant 0 : index
    %1 = vector.load %arg2[%c0_1, %c0_2] : memref<16x128xf32, #tpu.memory_space<vmem>>, vector<16x128xf32>
    tpu.vector_store %arg2[%c0_1, %c0_2], %0 {strides = array<i32>} : memref<16x128xf32, #tpu.memory_space<vmem>>, vector<16x128xf32>,
    return
  }
  func.func @transform_0(%arg0: i32) -> (i32, i32) {
    %c0_i32 = arith.constant 0 : i32
    %c0_i32_0 = arith.constant 0 : i32
    return %arg0, %c0_i32 : i32, i32
  }
  func.func @transform_1(%arg0: i32) -> (i32, i32) {
    %c0_i32 = arith.constant 0 : i32
    %c0_i32_0 = arith.constant 0 : i32
    return %arg0, %c0_i32 : i32, i32
  }
}

</mosaic_0001>

<llo_original>
// kernel: decoder_forward.1
$region0: #{decoder_forward.1}
  #allocation0 [shape = 'u32[]', space=smem, size = 0x4, offset = 0x4, fixed_abs, tag = 'smem constant byte address 0x4 - core index']
  #allocation1 [shape = 'u32[144,128]{1,0:T(1,128)}', space=vmem, size = 0x12000, scoped, tag = 'internal scratch']
  %s0 = inlined_call_operand.vmem [shape: f32[16,128], index: 0, kind: input, shape index: {}, may-alias: {0,1}]
  %s1 = inlined_call_operand.vmem [shape: f32[16,128], index: 1, kind: output, shape index: {}, may-alias: {0,1}]
  %s2 = sld [smem:[#allocation0]]
  $region14: #{decoder_forward.1} parent=0
    _
  %s4 = ssub.s32 1, %s2
  %s5 = scalar_select 0, %s4, %s2
  // Predicated region
  $region2: #{decoder_forward.1} parent=0 // pred_check
    _
  $region3: #{decoder_forward.1} parent=0 // pred_check_branch
    %7 = sbr.rel (0) target = $region5
  $region4: #{decoder_forward.1} parent=0 // pred_region
    _
  $region5: #{decoder_forward.1} parent=0 // pred_fallthru
    _
  %v8 = vld [vmem:[%s0] sm:$0xff]
  %v9 = vld [vmem:[%s0 + $0x8] sm:$0xff]
  %10 = vst [vmem:[%s1] sm:$0xff] %v8
  %11 = vst [vmem:[%s1 + $0x8] sm:$0xff] %v9
  // Predicated region
  $region6: #{decoder_forward.1} parent=0 // pred_check
    _
  $region7: #{decoder_forward.1} parent=0 // pred_check_branch
    %13 = sbr.rel (0) target = $region9
  $region8: #{decoder_forward.1} parent=0 // pred_region
    _
  $region9: #{decoder_forward.1} parent=0 // pred_fallthru
    _
  // Predicated region
  $region10: #{decoder_forward.1} parent=0 // pred_check
    _
  $region11: #{decoder_forward.1} parent=0 // pred_check_branch
    %15 = sbr.rel (0) target = $region13
  $region12: #{decoder_forward.1} parent=0 // pred_region
    _
  $region13: #{decoder_forward.1} parent=0 // pred_fallthru
    _

</llo_original>
